<compile_context>
chip_gen: v7x
topology: tpu7x:2x2x1
jax: 0.10.0
libtpu: 0.0.40
codegen_flags: <defaults>
</compile_context>

<pallas_src>
import jax
import jax.numpy as jnp
from jax import lax
from jax.experimental import pallas as pl
from jax.experimental.pallas import tpu as pltpu

_LANE = 128
_VMEM_TILE_BUDGET = 24 * 1024 * 1024   # double-buffered tile bytes (headroom under 32 MiB)


def _round_up(x: int, m: int) -> int:
    return (x + m - 1) // m * m


def fast_sigmoid(x):
    """sigmoid(x) == 0.5 * (tanh(x / 2) + 1): one EUP op, no full-precision divide."""
    return 0.5 * (jnp.tanh(0.5 * x) + 1.0)


def _make_inner_product_kernel(act):
    def kernel(a_ref, b_ref, o_ref):
        # a_ref: (TM, D) row tile of z ; b_ref: (TN, D) row tile of z
        # o_ref: (TM, TN) = act(a @ b.T), activation fused into the store epilogue.
        res = lax.dot_general(
            a_ref[...], b_ref[...],
            dimension_numbers=(((1,), (1,)), ((), ())),   # 'md,nd->mn'
            preferred_element_type=jnp.float32)
        o_ref[...] = act(res).astype(o_ref.dtype)
    return kernel


def inner_product_decoder(z, *, dropout: float = 0.0, training: bool = False,
                          act=lambda x: x,
                          tm: int = 1024, tn: int = 1024,
                          out_dtype=None,
                          transcendentals_per_element: int = 0):
    """adj = act(z @ z.T) — the InnerProductDecoder forward pass.

    Eval-mode semantics (dropout is identity).  `act` must be JAX-traceable and
    elementwise; it is fused into the kernel epilogue.  For bounded activations
    (sigmoid) pass out_dtype=jnp.bfloat16 to halve the dominant N^2 write bytes.
    """
    if training and dropout > 0.0:
        # TODO(synk): training-mode dropout needs an in-kernel pltpu.prng_random_bits mask.
        raise NotImplementedError("training-mode dropout (p > 0) is not implemented")

    N, D = z.shape
    out_dtype = z.dtype if out_dtype is None else out_dtype
    in_sz = jnp.dtype(z.dtype).itemsize
    out_sz = jnp.dtype(out_dtype).itemsize

    # ---- tile selection (128-aligned, clamped to N; no padding of the arrays) ----
    def _pick(t):
        if N <= _LANE:
            return N                                   # single full-dim block
        return min(_round_up(t, _LANE), _round_up(N, _LANE))

    tm = _pick(tm)
    tn = _pick(tn)

    # Keep >= 2 blocks along parallel axis 0 so a 2-TC chip (v7x) uses both cores.
    if N > _LANE and pl.cdiv(N, tm) < 2:
        tm = max(_LANE, _round_up(pl.cdiv(N, 2), _LANE))

    # VMEM budget check: double-buffered input tiles + double-buffered output tile.
    def _shrink(t):
        return max(_LANE, _round_up(t // 2, _LANE))

    while (2 * ((tm + tn) * D * in_sz + tm * tn * out_sz) > _VMEM_TILE_BUDGET
           and max(tm, tn) > _LANE):
        if tn >= tm and tn > _LANE:
            tn = _shrink(tn)
        else:
            tm = _shrink(tm)
    # TODO(synk): for very large D add an innermost "arbitrary" K axis with a VMEM
    # f32 accumulator + pl.when init/finalize instead of loading all of D per block.

    grid = (pl.cdiv(N, tm), pl.cdiv(N, tn))

    cost = pl.CostEstimate(
        flops=2 * N * N * D,
        transcendentals=N * N * transcendentals_per_element,
        bytes_accessed=(N * N * out_sz
                        + (grid[0] + grid[1]) * N * D * in_sz),
    )

    out = pl.pallas_call(
        _make_inner_product_kernel(act),
        out_shape=jax.ShapeDtypeStruct((N, N), out_dtype),
        grid_spec=pltpu.PrefetchScalarGridSpec(
            num_scalar_prefetch=0,
            grid=grid,
            in_specs=[
                pl.BlockSpec((tm, D), lambda i, j: (i, 0)),   # row tile i of z
                pl.BlockSpec((tn, D), lambda i, j: (j, 0)),   # row tile j of z
            ],
            out_specs=pl.BlockSpec((tm, tn), lambda i, j: (i, j)),
        ),
        compiler_params=pltpu.CompilerParams(
            dimension_semantics=("parallel", "parallel"),
            vmem_limit_bytes=32 * 1024 * 1024,
        ),
        cost_estimate=cost,
    )(z, z)
    return out


if __name__ == "__main__":
    # Example 1: identity activation (module default), tile-aligned N, f32 out.
    key = jax.random.PRNGKey(0)
    N, D = 256, 64
    z = jax.random.normal(key, (N, D), dtype=jnp.float32)

    adj = jax.block_until_ready(inner_product_decoder(z))
    ref = z @ z.T
    assert adj.shape == (N, N)
    assert jnp.allclose(adj, ref, atol=1e-4, rtol=1e-4), "identity-act mismatch"

    # Example 2: non-tile-aligned N (boundary-clipped blocks, no pad/slice pass)
    # with a fused single-EUP sigmoid epilogue.
    N2, D2 = 200, 48
    z2 = jax.random.normal(jax.random.PRNGKey(0), (N2, D2), dtype=jnp.float32)

    adj2 = jax.block_until_ready(
        inner_product_decoder(z2, act=fast_sigmoid, transcendentals_per_element=1))
    ref2 = jax.nn.sigmoid(z2 @ z2.T)
    assert adj2.shape == (N2, N2)
    assert jnp.allclose(adj2, ref2, atol=1e-5, rtol=1e-5), "sigmoid-act mismatch"

    # Example 3: bf16 output store (halves the dominant N^2 HBM write traffic).
    adj3 = jax.block_until_ready(
        inner_product_decoder(z2, act=fast_sigmoid, out_dtype=jnp.bfloat16,
                              transcendentals_per_element=1))
    assert adj3.dtype == jnp.bfloat16
    assert jnp.allclose(adj3.astype(jnp.float32), ref2, atol=2e-2, rtol=2e-2), \
        "bf16-store mismatch"

    print("KERNEL_OK")
</pallas_src>

<mosaic_0001>
module attributes {stable_mosaic.version = 11 : i64} {
  func.func @kernel(%arg0: i32, %arg1: i32, %arg2: memref<128x64xf32, #tpu.memory_space<vmem>>, %arg3: memref<256x64xf32, #tpu.memory_space<vmem>>, %arg4: memref<128x256xf32, #tpu.memory_space<vmem>>) attributes {dimension_semantics = [#tpu.dimension_semantics<parallel>, #tpu.dimension_semantics<parallel>], iteration_bounds = array<i64: 2, 1>, scalar_prefetch = 0 : i64, scratch_operands = 0 : i64, tpu.core_type = #tpu.core_type<tc>, window_params = [{transform_indices = @transform_0, window_bounds = array<i64: 128, 64>}, {transform_indices = @transform_1, window_bounds = array<i64: 256, 64>}, {transform_indices = @transform_2, window_bounds = array<i64: 128, 256>}]} {
    %c0 = arith.constant 0 : index
    %c0_0 = arith.constant 0 : index
    %0 = vector.load %arg2[%c0, %c0_0] : memref<128x64xf32, #tpu.memory_space<vmem>>, vector<128x64xf32>
    %c0_1 = arith.constant 0 : index
    %c0_2 = arith.constant 0 : index
    %1 = vector.load %arg3[%c0_1, %c0_2] : memref<256x64xf32, #tpu.memory_space<vmem>>, vector<256x64xf32>
    %cst = arith.constant dense<0.000000e+00> : vector<128x256xf32>
    %2 = tpu.matmul %0, %1, %cst {dimension_numbers = #tpu.dot_dimension_numbers<[1], [1], [0], [0], [0, 0, 1, 0], [], []>} : vector<128x64xf32>, vector<256x64xf32>, vector<128x256xf32> -> vector<128x256xf32>
    %c0_3 = arith.constant 0 : index
    %c0_4 = arith.constant 0 : index
    %3 = vector.load %arg4[%c0_3, %c0_4] : memref<128x256xf32, #tpu.memory_space<vmem>>, vector<128x256xf32>
    tpu.vector_store %arg4[%c0_3, %c0_4], %2 {strides = array<i32>} : memref<128x256xf32, #tpu.memory_space<vmem>>, vector<128x256xf32>,
    return
  }
  func.func @transform_0(%arg0: i32, %arg1: i32) -> (i32, i32) {
    %c0_i32 = arith.constant 0 : i32
    %c0_i32_0 = arith.constant 0 : i32
    return %arg0, %c0_i32 : i32, i32
  }
  func.func @transform_1(%arg0: i32, %arg1: i32) -> (i32, i32) {
    %c0_i32 = arith.constant 0 : i32
    %c0_i32_0 = arith.constant 0 : i32
    return %arg1, %c0_i32 : i32, i32
  }
  func.func @transform_2(%arg0: i32, %arg1: i32) -> (i32, i32) {
    %c0_i32 = arith.constant 0 : i32
    return %arg0, %arg1 : i32, i32
  }
}

</mosaic_0001>

<llo_original>
// kernel: tpu_custom_call.1
$region0: #{tpu_custom_call.1}
  #allocation0 [shape = 'u32[]', space=smem, size = 0x4, offset = 0x4, fixed_abs, tag = 'smem constant byte address 0x4 - core index']
  #allocation1 [shape = 'u32[144,128]{1,0:T(1,128)}', space=vmem, size = 0x12000, scoped, tag = 'internal scratch']
  %s0 = inlined_call_operand.vmem [shape: f32[256,64], index: 0, kind: input, shape index: {}]
  %s1 = inlined_call_operand.vmem [shape: f32[256,64], index: 1, kind: input, shape index: {}]
  %s2 = inlined_call_operand.hbm [shape: f32[256,256], index: 2, kind: output, shape index: {}]
  %s3 = sld [smem:[#allocation0]]
  $region41: #{tpu_custom_call.1} parent=0
    _
  %s5 = ssub.s32 1, %s3
  %s6 = scalar_select 0, %s5, %s3
  $region1: #{tpu_custom_call.1} parent=0
    #allocation2 [shape = 'u8[262144]{0}', space=vmem, size = 0x40000, scoped, tag = 'output window, operand 0']
    #allocation3 [shape = 's32[2]{0}', space=sflag, size = 0x8, scoped, tag = 'scoped memory for tpu_custom_call.1']
    %7 = vsyncpa [#allocation3], 0
    %s8 = scalar_lea.sflag [#allocation3], 1
    %9 = vsyncpa %s8, 0
    loop: start=0, step=1, limit=4
    $region2: #{tpu_custom_call.1} parent=1 // loop_pre_header
      _
    $region3: #{tpu_custom_call.1} parent=1 // loop_header
      %s11 = sphi 0, %s15
      %p12 = scmp.ge.s32.totalorder %s11, 4
      %s18 = sphi 0, %s30
      %s19 = sphi 0, %s26
      %s20 = sphi 0, %s18
      %s21 = sphi 0, %s19
      %s22 = sphi 0, %s20
      %s23 = sphi 0, %s21
      %s33 = sphi 0, %s35
      %s36 = sphi 0, %s33
      %s37 = sphi 0, %s36
      %s53 = sphi 0, %s37
      %s59 = sphi 0, %s61
      %s62 = sphi 0, %s59
      %s63 = sphi 0, %s62
      %s79 = sphi 0, %s63
      %s87 = sphi 0, %s89
      %s90 = sphi 0, %s87
      %s91 = sphi 0, %s90
      %s107 = sphi 0, %s91
    $region4: #{tpu_custom_call.1} parent=1 // loop_header_branch
      %14 = sbr.rel (%p12) target = $region8
    $region5: #{tpu_custom_call.1} parent=1 // loop_body
      %s16 = ssub.s32 %s11, 1
      %s17 = ssub.s32 %s11, 2
      %s24 = sadd.s32 1, %s19
      %p25 = scmp.ge.s32.totalorder %s24, 1
      %s26 = scalar_select %p25, 0, %s24
      %s27 = sadd.s32 1, %s18
      %s28 = scalar_select %p25, %s27, %s18
      %p29 = scmp.ge.s32.totalorder %s28, 2
      %s30 = scalar_select %p29, 0, %s28
      %s31 = ssub.s32 %s18, %s30
      %p32 = scmp.eq.s32.totalorder %s31, 0
      %s34 = sadd.s32 %s33, 1
      %s35 = scalar_select %p32, %s33, %s34
      %p38 = pneg %p32
      %p39 = scmp.eq.s32.totalorder %s11, 1
      %p40 = por %p38, %p39
      %p41 = scmp.ne.s32.totalorder %s33, %s36
      %p42 = scmp.eq.s32.totalorder %s11, 0
      %p43 = por %p41, %p42
      %p44 = scmp.ne.s32.totalorder %s33, %s36
      %p45 = scmp.eq.s32.totalorder %s16, 1
      %p46 = por %p44, %p45
      %p47 = scmp.ne.s32.totalorder %s36, %s37
      %p48 = scmp.eq.s32.totalorder %s16, 0
      %p49 = por %p47, %p48
      %p50 = scmp.ne.s32.totalorder %s36, %s37
      %p51 = scmp.eq.s32.totalorder %s17, 1
      %p52 = por %p50, %p51
      %p54 = scmp.ne.s32.totalorder %s37, %s53
      %p55 = scmp.eq.s32.totalorder %s17, 0
      %p56 = por %p54, %p55
      %s57 = ssub.s32 %s19, %s26
      %p58 = scmp.eq.s32.totalorder %s57, 0
      %s60 = sadd.s32 %s59, 1
      %s61 = scalar_select %p58, %s59, %s60
      %p64 = pneg %p58
      %p65 = scmp.eq.s32.totalorder %s11, 1
      %p66 = por %p64, %p65
      %p67 = scmp.ne.s32.totalorder %s59, %s62
      %p68 = scmp.eq.s32.totalorder %s11, 0
      %p69 = por %p67, %p68
      %p70 = scmp.ne.s32.totalorder %s59, %s62
      %p71 = scmp.eq.s32.totalorder %s16, 1
      %p72 = por %p70, %p71
      %p73 = scmp.ne.s32.totalorder %s62, %s63
      %p74 = scmp.eq.s32.totalorder %s16, 0
      %p75 = por %p73, %p74
      %p76 = scmp.ne.s32.totalorder %s62, %s63
      %p77 = scmp.eq.s32.totalorder %s17, 1
      %p78 = por %p76, %p77
      %p80 = scmp.ne.s32.totalorder %s63, %s79
      %p81 = scmp.eq.s32.totalorder %s17, 0
      %p82 = por %p80, %p81
      %s83 = ssub.s32 %s18, %s30
      %s84 = ssub.s32 %s19, %s26
      %s85 = sor.u32 %s83, %s84
      %p86 = scmp.eq.s32.totalorder %s85, 0
      %s88 = sadd.s32 %s87, 1
      %s89 = scalar_select %p86, %s87, %s88
      %p92 = pneg %p86
      %p93 = scmp.eq.s32.totalorder %s11, 1
      %p94 = por %p92, %p93
      %p95 = scmp.ne.s32.totalorder %s87, %s90
      %p96 = scmp.eq.s32.totalorder %s11, 0
      %p97 = por %p95, %p96
      %p98 = scmp.ne.s32.totalorder %s87, %s90
      %p99 = scmp.eq.s32.totalorder %s16, 1
      %p100 = por %p98, %p99
      %p101 = scmp.ne.s32.totalorder %s90, %s91
      %p102 = scmp.eq.s32.totalorder %s16, 0
      %p103 = por %p101, %p102
      %p104 = scmp.ne.s32.totalorder %s90, %s91
      %p105 = scmp.eq.s32.totalorder %s17, 1
      %p106 = por %p104, %p105
      %p108 = scmp.ne.s32.totalorder %s91, %s107
      %p109 = scmp.eq.s32.totalorder %s17, 0
      %p110 = por %p108, %p109
      %p111 = scmp.le.s32.totalorder 1, %s11
      %p112 = scmp.lt.s32.totalorder %s11, 3
      %p113 = pnand %p111, %p112
      %p114 = pneg %p113
      // Predicated region
      $region9: #{tpu_custom_call.1} parent=5 // pred_check
        _
      $region10: #{tpu_custom_call.1} parent=5 // pred_check_branch
        %116 = sbr.rel (%p113) target = $region12
      $region11: #{tpu_custom_call.1} parent=5 // pred_region
        %s117 = ssub.s32 %s11, 1
        // Predicated region
        $region13: #{tpu_custom_call.1} parent=11 // pred_check
          %p118 = pneg %p75
        $region14: #{tpu_custom_call.1} parent=11 // pred_check_branch
          %120 = sbr.rel (%p118) target = $region16
        $region15: #{tpu_custom_call.1} parent=11 // pred_region
          %s121 = smul.u32 32, %s21
          %p122 = scmp.lt.s32.totalorder %s121, 31
          %s123 = scalar_select %p122, %s121, 31
          %s124 = smul.addr %s123, 8
          %s125 = scalar_lea.vmem %s1, %s124
          %s126 = smul.u32 32, %s21
        $region16: #{tpu_custom_call.1} parent=11 // pred_fallthru
          _
      $region12: #{tpu_custom_call.1} parent=5 // pred_fallthru
        _
      %p127 = scmp.lt.s32.totalorder %s11, 2
      // Predicated region
      $region17: #{tpu_custom_call.1} parent=5 // pred_check
        %p128 = pneg %p127
      $region18: #{tpu_custom_call.1} parent=5 // pred_check_branch
        %130 = sbr.rel (%p128) target = $region20
      $region19: #{tpu_custom_call.1} parent=5 // pred_region
        // Predicated region
        $region21: #{tpu_custom_call.1} parent=19 // pred_check
          %p131 = pneg %p43
        $region22: #{tpu_custom_call.1} parent=19 // pred_check_branch
          %133 = sbr.rel (%p131) target = $region24
        $region23: #{tpu_custom_call.1} parent=19 // pred_region
          %s134 = smul.u32 16, %s18
          %p135 = scmp.lt.s32.totalorder %s134, 31
          %s136 = scalar_select %p135, %s134, 31
          %s137 = smul.addr %s136, 8
          %s138 = scalar_lea.vmem %s0, %s137
          %s139 = smul.u32 16, %s18
        $region24: #{tpu_custom_call.1} parent=19 // pred_fallthru
          _
      $region20: #{tpu_custom_call.1} parent=5 // pred_fallthru
        _
      %p140 = scmp.le.s32.totalorder 1, %s11
      %p141 = scmp.lt.s32.totalorder %s11, 3
      %p142 = pnand %p140, %p141
      %p143 = pneg %p142
      // Predicated region
      $region25: #{tpu_custom_call.1} parent=5 // pred_check
        _
      $region26: #{tpu_custom_call.1} parent=5 // pred_check_branch
        %145 = sbr.rel (%p142) target = $region28
      $region27: #{tpu_custom_call.1} parent=5 // pred_region
        %s146 = ssub.s32 %s11, 1
        %s147 = smul.u32 16, %s20
        %p148 = scmp.lt.s32.totalorder %s147, 31
        %s149 = scalar_select %p148, %s147, 31
        %s150 = smul.addr %s149, 8
        %s151 = scalar_lea.vmem %s0, %s150
        %p152 = pneg %p49
        %p153 = pneg %p46
        %s154 = smul.u32 32, %s21
        %p155 = scmp.lt.s32.totalorder %s154, 31
        %s156 = scalar_select %p155, %s154, 31
        %s157 = smul.addr %s156, 8
        %s158 = scalar_lea.vmem %s1, %s157
        %p159 = pneg %p75
        %p160 = pneg %p72
        %p161 = pneg %p103
        %p162 = pneg %p100
        %s163 = sand.u32 %s90, 1
        %s164 = scalar_lea.sflag [#allocation3], %s163
        %s165 = sand.u32 %s90, 1
        %s166 = smul.addr %s165, 256
        %s167 = scalar_lea.vmem [#allocation2], %s166
        %s168 = smul.u32 16, %s20
        %p169 = scmp.lt.s32.totalorder %s168, 31
        %s170 = scalar_select %p169, %s168, 31
        %s171 = smul.addr %s170, 8
        %s172 = scalar_lea.vmem %s0, %s171
        %s173 = smul.u32 16, %s20
        %s174 = smul.u32 32, %s21
        %p175 = scmp.lt.s32.totalorder %s174, 31
        %s176 = scalar_select %p175, %s174, 31
        %s177 = smul.addr %s176, 8
        %s178 = scalar_lea.vmem %s1, %s177
        %s179 = smul.u32 32, %s21
        %s180 = smul.u32 16, %s20
        %s181 = smul.u32 2, %s21
        %v182 = vld [vmem:[%s172] sm:$0xff]
        %v183 = vld [vmem:[%s172 + $0x8] sm:$0xff]
        %v184 = vld [vmem:[%s172 + $0x10] sm:$0xff]
        %v185 = vld [vmem:[%s172 + $0x18] sm:$0xff]
        %v186 = vld [vmem:[%s172 + $0x20] sm:$0xff]
        %v187 = vld [vmem:[%s172 + $0x28] sm:$0xff]
        %v188 = vld [vmem:[%s172 + $0x30] sm:$0xff]
        %v189 = vld [vmem:[%s172 + $0x38] sm:$0xff]
        %v190 = vld [vmem:[%s172 + $0x40] sm:$0xff]
        %v191 = vld [vmem:[%s172 + $0x48] sm:$0xff]
        %v192 = vld [vmem:[%s172 + $0x50] sm:$0xff]
        %v193 = vld [vmem:[%s172 + $0x58] sm:$0xff]
        %v194 = vld [vmem:[%s172 + $0x60] sm:$0xff]
        %v195 = vld [vmem:[%s172 + $0x68] sm:$0xff]
        %v196 = vld [vmem:[%s172 + $0x70] sm:$0xff]
        %v197 = vld [vmem:[%s172 + $0x78] sm:$0xff]
        %v198 = vld [vmem:[%s178] sm:$0xff]
        %v199 = vld [vmem:[%s178 + $0x8] sm:$0xff]
        %v200 = vld [vmem:[%s178 + $0x10] sm:$0xff]
        %v201 = vld [vmem:[%s178 + $0x18] sm:$0xff]
        %v202 = vld [vmem:[%s178 + $0x20] sm:$0xff]
        %v203 = vld [vmem:[%s178 + $0x28] sm:$0xff]
        %v204 = vld [vmem:[%s178 + $0x30] sm:$0xff]
        %v205 = vld [vmem:[%s178 + $0x38] sm:$0xff]
        %v206 = vld [vmem:[%s178 + $0x40] sm:$0xff]
        %v207 = vld [vmem:[%s178 + $0x48] sm:$0xff]
        %v208 = vld [vmem:[%s178 + $0x50] sm:$0xff]
        %v209 = vld [vmem:[%s178 + $0x58] sm:$0xff]
        %v210 = vld [vmem:[%s178 + $0x60] sm:$0xff]
        %v211 = vld [vmem:[%s178 + $0x68] sm:$0xff]
        %v212 = vld [vmem:[%s178 + $0x70] sm:$0xff]
        %v213 = vld [vmem:[%s178 + $0x78] sm:$0xff]
        %v214 = vld [vmem:[%s178 + $0x80] sm:$0xff]
        %v215 = vld [vmem:[%s178 + $0x88] sm:$0xff]
        %v216 = vld [vmem:[%s178 + $0x90] sm:$0xff]
        %v217 = vld [vmem:[%s178 + $0x98] sm:$0xff]
        %v218 = vld [vmem:[%s178 + $0xa0] sm:$0xff]
        %v219 = vld [vmem:[%s178 + $0xa8] sm:$0xff]
        %v220 = vld [vmem:[%s178 + $0xb0] sm:$0xff]
        %v221 = vld [vmem:[%s178 + $0xb8] sm:$0xff]
        %v222 = vld [vmem:[%s178 + $0xc0] sm:$0xff]
        %v223 = vld [vmem:[%s178 + $0xc8] sm:$0xff]
        %v224 = vld [vmem:[%s178 + $0xd0] sm:$0xff]
        %v225 = vld [vmem:[%s178 + $0xd8] sm:$0xff]
        %v226 = vld [vmem:[%s178 + $0xe0] sm:$0xff]
        %v227 = vld [vmem:[%s178 + $0xe8] sm:$0xff]
        %v228 = vld [vmem:[%s178 + $0xf0] sm:$0xff]
        %v229 = vld [vmem:[%s178 + $0xf8] sm:$0xff]
        %vm230 = vcmask 523264
        %v232 = vsel %vm230, %v182, 0
        %v235 = vsel %vm230, %v183, 0
        %v238 = vsel %vm230, %v184, 0
        %v241 = vsel %vm230, %v185, 0
        %v244 = vsel %vm230, %v186, 0
        %v247 = vsel %vm230, %v187, 0
        %v250 = vsel %vm230, %v188, 0
        %v253 = vsel %vm230, %v189, 0
        %v256 = vsel %vm230, %v190, 0
        %v259 = vsel %vm230, %v191, 0
        %v262 = vsel %vm230, %v192, 0
        %v265 = vsel %vm230, %v193, 0
        %v268 = vsel %vm230, %v194, 0
        %v271 = vsel %vm230, %v195, 0
        %v274 = vsel %vm230, %v196, 0
        %v277 = vsel %vm230, %v197, 0
        %v280 = vsel %vm230, %v198, 0
        %v283 = vsel %vm230, %v199, 0
        %v286 = vsel %vm230, %v200, 0
        %v289 = vsel %vm230, %v201, 0
        %v292 = vsel %vm230, %v202, 0
        %v295 = vsel %vm230, %v203, 0
        %v298 = vsel %vm230, %v204, 0
        %v301 = vsel %vm230, %v205, 0
        %v304 = vsel %vm230, %v206, 0
        %v307 = vsel %vm230, %v207, 0
        %v310 = vsel %vm230, %v208, 0
        %v313 = vsel %vm230, %v209, 0
        %v316 = vsel %vm230, %v210, 0
        %v319 = vsel %vm230, %v211, 0
        %v322 = vsel %vm230, %v212, 0
        %v325 = vsel %vm230, %v213, 0
        %v328 = vsel %vm230, %v214, 0
        %v331 = vsel %vm230, %v215, 0
        %v334 = vsel %vm230, %v216, 0
        %v337 = vsel %vm230, %v217, 0
        %v340 = vsel %vm230, %v218, 0
        %v343 = vsel %vm230, %v219, 0
        %v346 = vsel %vm230, %v220, 0
        %v349 = vsel %vm230, %v221, 0
        %v352 = vsel %vm230, %v222, 0
        %v355 = vsel %vm230, %v223, 0
        %v358 = vsel %vm230, %v224, 0
        %v361 = vsel %vm230, %v225, 0
        %v364 = vsel %vm230, %v226, 0
        %v367 = vsel %vm230, %v227, 0
        %v370 = vsel %vm230, %v228, 0
        %v373 = vsel %vm230, %v229, 0
        %375 = vmatprep.subr.mxu0 0.0
        %376 = vmatpush1.xpose.msra.mxu0 %v280
        %377 = vmatprep.subr.mxu0 0.0
        %378 = vmatpush1.xpose.msra.mxu0 %v283
        %379 = vmatprep.subr.mxu0 0.0
        %380 = vmatpush1.xpose.msra.mxu0 %v286
        %381 = vmatprep.subr.mxu0 0.0
        %382 = vmatpush1.xpose.msra.mxu0 %v289
        %383 = vmatprep.subr.mxu0 0.0
        %384 = vmatpush1.xpose.msra.mxu0 %v292
        %385 = vmatprep.subr.mxu0 0.0
        %386 = vmatpush1.xpose.msra.mxu0 %v295
        %387 = vmatprep.subr.mxu0 0.0
        %388 = vmatpush1.xpose.msra.mxu0 %v298
        %389 = vmatprep.subr.mxu0 0.0
        %390 = vmatpush1.xpose.msra.mxu0 %v301
        %391 = vmatprep.subr.mxu0 0.0
        %392 = vmatpush1.xpose.msra.mxu0 %v304
        %393 = vmatprep.subr.mxu0 0.0
        %394 = vmatpush1.xpose.msra.mxu0 %v307
        %395 = vmatprep.subr.mxu0 0.0
        %396 = vmatpush1.xpose.msra.mxu0 %v310
        %397 = vmatprep.subr.mxu0 0.0
        %398 = vmatpush1.xpose.msra.mxu0 %v313
        %399 = vmatprep.subr.mxu0 0.0
        %400 = vmatpush1.xpose.msra.mxu0 %v316
        %401 = vmatprep.subr.mxu0 0.0
        %402 = vmatpush1.xpose.msra.mxu0 %v319
        %403 = vmatprep.subr.mxu0 0.0
        %404 = vmatpush1.xpose.msra.mxu0 %v322
        %405 = vmatprep.subr.mxu0 0.0
        %406 = vmatpush1.xpose.msra.mxu0 %v325
        %407 = vmatprep.subr.mxu0 0.0
        %408 = vmatpush1.xpose.msra.mxu0 %v328
        %409 = vmatprep.subr.mxu0 0.0
        %410 = vmatpush1.xpose.msra.mxu0 %v331
        %411 = vmatprep.subr.mxu0 0.0
        %412 = vmatpush1.xpose.msra.mxu0 %v334
        %413 = vmatprep.subr.mxu0 0.0
        %414 = vmatpush1.xpose.msra.mxu0 %v337
        %415 = vmatprep.subr.mxu0 0.0
        %416 = vmatpush1.xpose.msra.mxu0 %v340
        %417 = vmatprep.subr.mxu0 0.0
        %418 = vmatpush1.xpose.msra.mxu0 %v343
        %419 = vmatprep.subr.mxu0 0.0
        %420 = vmatpush1.xpose.msra.mxu0 %v346
        %421 = vmatprep.subr.mxu0 0.0
        %422 = vmatpush1.xpose.msra.mxu0 %v349
        %423 = vmatprep.subr.mxu0 0.0
        %424 = vmatpush1.xpose.msra.mxu0 %v352
        %425 = vmatprep.subr.mxu0 0.0
        %426 = vmatpush1.xpose.msra.mxu0 %v355
        %427 = vmatprep.subr.mxu0 0.0
        %428 = vmatpush1.xpose.msra.mxu0 %v358
        %429 = vmatprep.subr.mxu0 0.0
        %430 = vmatpush1.xpose.msra.mxu0 %v361
        %431 = vmatprep.subr.mxu0 0.0
        %432 = vmatpush1.xpose.msra.mxu0 %v364
        %433 = vmatprep.subr.mxu0 0.0
        %434 = vmatpush1.xpose.msra.mxu0 %v367
        %435 = vmatprep.subr.mxu0 0.0
        %436 = vmatpush1.xpose.msra.mxu0 %v370
        %437 = vmatprep.subr.mxu0 0.0
        %438 = vmatpush1.xpose.msra.mxu0 %v373
        %439 = vmatprep.mubr.f32.mxu0 0.0
        %440 = vmatmul.mubr.f32.gmra.mrb[0].mxu0 %v232
        %v441 = vpop.f32.mrb[0].mxu0
        %v442 = vadd.f32 0.0, %v441
        %v443 = vpop.f32.mrb[0].mxu0
        %v444 = vadd.f32 0.0, %v443
        %445 = vmatprep.mubr.f32.mxu0 0.0
        %446 = vmatmul.mubr.f32.gmra.mrb[0].mxu0 %v235
        %v447 = vpop.f32.mrb[0].mxu0
        %v448 = vadd.f32 0.0, %v447
        %v449 = vpop.f32.mrb[0].mxu0
        %v450 = vadd.f32 0.0, %v449
        %451 = vmatprep.mubr.f32.mxu0 0.0
        %452 = vmatmul.mubr.f32.gmra.mrb[0].mxu0 %v238
        %v453 = vpop.f32.mrb[0].mxu0
        %v454 = vadd.f32 0.0, %v453
        %v455 = vpop.f32.mrb[0].mxu0
        %v456 = vadd.f32 0.0, %v455
        %457 = vmatprep.mubr.f32.mxu0 0.0
        %458 = vmatmul.mubr.f32.gmra.mrb[0].mxu0 %v241
        %v459 = vpop.f32.mrb[0].mxu0
        %v460 = vadd.f32 0.0, %v459
        %v461 = vpop.f32.mrb[0].mxu0
        %v462 = vadd.f32 0.0, %v461
        %463 = vmatprep.mubr.f32.mxu0 0.0
        %464 = vmatmul.mubr.f32.gmra.mrb[0].mxu0 %v244
        %v465 = vpop.f32.mrb[0].mxu0
        %v466 = vadd.f32 0.0, %v465
        %v467 = vpop.f32.mrb[0].mxu0
        %v468 = vadd.f32 0.0, %v467
        %469 = vmatprep.mubr.f32.mxu0 0.0
        %470 = vmatmul.mubr.f32.gmra.mrb[0].mxu0 %v247
        %v471 = vpop.f32.mrb[0].mxu0
        %v472 = vadd.f32 0.0, %v471
        %v473 = vpop.f32.mrb[0].mxu0
        %v474 = vadd.f32 0.0, %v473
        %475 = vmatprep.mubr.f32.mxu0 0.0
        %476 = vmatmul.mubr.f32.gmra.mrb[0].mxu0 %v250
        %v477 = vpop.f32.mrb[0].mxu0
        %v478 = vadd.f32 0.0, %v477
        %v479 = vpop.f32.mrb[0].mxu0
        %v480 = vadd.f32 0.0, %v479
        %481 = vmatprep.mubr.f32.mxu0 0.0
        %482 = vmatmul.mubr.f32.gmra.mrb[0].mxu0 %v253
        %v483 = vpop.f32.mrb[0].mxu0
        %v484 = vadd.f32 0.0, %v483
        %v485 = vpop.f32.mrb[0].mxu0
        %v486 = vadd.f32 0.0, %v485
        %487 = vmatprep.mubr.f32.mxu0 0.0
        %488 = vmatmul.mubr.f32.gmra.mrb[0].mxu0 %v256
        %v489 = vpop.f32.mrb[0].mxu0
        %v490 = vadd.f32 0.0, %v489
        %v491 = vpop.f32.mrb[0].mxu0
        %v492 = vadd.f32 0.0, %v491
        %493 = vmatprep.mubr.f32.mxu0 0.0
        %494 = vmatmul.mubr.f32.gmra.mrb[0].mxu0 %v259
        %v495 = vpop.f32.mrb[0].mxu0
        %v496 = vadd.f32 0.0, %v495
        %v497 = vpop.f32.mrb[0].mxu0
        %v498 = vadd.f32 0.0, %v497
        %499 = vmatprep.mubr.f32.mxu0 0.0
        %500 = vmatmul.mubr.f32.gmra.mrb[0].mxu0 %v262
        %v501 = vpop.f32.mrb[0].mxu0
        %v502 = vadd.f32 0.0, %v501
        %v503 = vpop.f32.mrb[0].mxu0
        %v504 = vadd.f32 0.0, %v503
        %505 = vmatprep.mubr.f32.mxu0 0.0
        %506 = vmatmul.mubr.f32.gmra.mrb[0].mxu0 %v265
        %v507 = vpop.f32.mrb[0].mxu0
        %v508 = vadd.f32 0.0, %v507
        %v509 = vpop.f32.mrb[0].mxu0
        %v510 = vadd.f32 0.0, %v509
        %511 = vmatprep.mubr.f32.mxu0 0.0
        %512 = vmatmul.mubr.f32.gmra.mrb[0].mxu0 %v268
        %v513 = vpop.f32.mrb[0].mxu0
        %v514 = vadd.f32 0.0, %v513
        %v515 = vpop.f32.mrb[0].mxu0
        %v516 = vadd.f32 0.0, %v515
        %517 = vmatprep.mubr.f32.mxu0 0.0
        %518 = vmatmul.mubr.f32.gmra.mrb[0].mxu0 %v271
        %v519 = vpop.f32.mrb[0].mxu0
        %v520 = vadd.f32 0.0, %v519
        %v521 = vpop.f32.mrb[0].mxu0
        %v522 = vadd.f32 0.0, %v521
        %523 = vmatprep.mubr.f32.mxu0 0.0
        %524 = vmatmul.mubr.f32.gmra.mrb[0].mxu0 %v274
        %v525 = vpop.f32.mrb[0].mxu0
        %v526 = vadd.f32 0.0, %v525
        %v527 = vpop.f32.mrb[0].mxu0
        %v528 = vadd.f32 0.0, %v527
        %529 = vmatprep.mubr.f32.mxu0 0.0
        %530 = vmatmul.mubr.f32.gmra.mrb[0].mxu0 %v277
        %v531 = vpop.f32.mrb[0].mxu0
        %v532 = vadd.f32 0.0, %v531
        %v533 = vpop.f32.mrb[0].mxu0
        %v534 = vadd.f32 0.0, %v533
        %535 = vdwg.mxu0
        %536 = vst [vmem:[%s167] sm:$0xff] %v442
        %537 = vst [vmem:[%s167 + $0x8] sm:$0xff] %v444
        %538 = vst [vmem:[%s167 + $0x10] sm:$0xff] %v448
        %539 = vst [vmem:[%s167 + $0x18] sm:$0xff] %v450
        %540 = vst [vmem:[%s167 + $0x20] sm:$0xff] %v454
        %541 = vst [vmem:[%s167 + $0x28] sm:$0xff] %v456
        %542 = vst [vmem:[%s167 + $0x30] sm:$0xff] %v460
        %543 = vst [vmem:[%s167 + $0x38] sm:$0xff] %v462
        %544 = vst [vmem:[%s167 + $0x40] sm:$0xff] %v466
        %545 = vst [vmem:[%s167 + $0x48] sm:$0xff] %v468
        %546 = vst [vmem:[%s167 + $0x50] sm:$0xff] %v472
        %547 = vst [vmem:[%s167 + $0x58] sm:$0xff] %v474
        %548 = vst [vmem:[%s167 + $0x60] sm:$0xff] %v478
        %549 = vst [vmem:[%s167 + $0x68] sm:$0xff] %v480
        %550 = vst [vmem:[%s167 + $0x70] sm:$0xff] %v484
        %551 = vst [vmem:[%s167 + $0x78] sm:$0xff] %v486
        %552 = vst [vmem:[%s167 + $0x80] sm:$0xff] %v490
        %553 = vst [vmem:[%s167 + $0x88] sm:$0xff] %v492
        %554 = vst [vmem:[%s167 + $0x90] sm:$0xff] %v496
        %555 = vst [vmem:[%s167 + $0x98] sm:$0xff] %v498
        %556 = vst [vmem:[%s167 + $0xa0] sm:$0xff] %v502
        %557 = vst [vmem:[%s167 + $0xa8] sm:$0xff] %v504
        %558 = vst [vmem:[%s167 + $0xb0] sm:$0xff] %v508
        %559 = vst [vmem:[%s167 + $0xb8] sm:$0xff] %v510
        %560 = vst [vmem:[%s167 + $0xc0] sm:$0xff] %v514
        %561 = vst [vmem:[%s167 + $0xc8] sm:$0xff] %v516
        %562 = vst [vmem:[%s167 + $0xd0] sm:$0xff] %v520
        %563 = vst [vmem:[%s167 + $0xd8] sm:$0xff] %v522
        %564 = vst [vmem:[%s167 + $0xe0] sm:$0xff] %v526
        %565 = vst [vmem:[%s167 + $0xe8] sm:$0xff] %v528
        %566 = vst [vmem:[%s167 + $0xf0] sm:$0xff] %v532
        %567 = vst [vmem:[%s167 + $0xf8] sm:$0xff] %v534
        %s568 = sand.u32 %s90, 1
        %s569 = scalar_lea.sflag [#allocation3], %s568
        %s570 = sand.u32 %s90, 1
        %s571 = smul.addr %s570, 256
        %s572 = scalar_lea.vmem [#allocation2], %s571
        // Predicated region
        $region29: #{tpu_custom_call.1} parent=27 // pred_check
          %p573 = pneg %p100
        $region30: #{tpu_custom_call.1} parent=27 // pred_check_branch
          %575 = sbr.rel (%p573) target = $region32
        $region31: #{tpu_custom_call.1} parent=27 // pred_region
          %s576 = smul.u32 16, %s20
          %s577 = smul.u32 2, %s21
          %s579 = ssub.s32 4096, 4096
          %580 = vsyncadd %s569, %s579
          %s581 = smul.addr %s576, 2
          %s582 = sadd.s32 %s577, %s581
          %s583 = smul.addr %s582, 128
          %s584 = scalar_lea.hbm %s2, %s583
          %s585 = sshll.u32 %s572, 4
          %s586 = int_to_ptr.vmem [resolvable:$true] %s585
          %591 = dma.vmem_to_hbm [thread:$0]  %s586, 4096, %s584, %s569, 256, 256, 16
        $region32: #{tpu_custom_call.1} parent=27 // pred_fallthru
          _
      $region28: #{tpu_custom_call.1} parent=5 // pred_fallthru
        _
      %p592 = scmp.le.s32.totalorder 2, %s11
      // Predicated region
      $region33: #{tpu_custom_call.1} parent=5 // pred_check
        %p593 = pneg %p592
      $region34: #{tpu_custom_call.1} parent=5 // pred_check_branch
        %595 = sbr.rel (%p593) target = $region36
      $region35: #{tpu_custom_call.1} parent=5 // pred_region
        %s596 = ssub.s32 %s11, 2
        // Predicated region
        $region37: #{tpu_custom_call.1} parent=35 // pred_check
          %p597 = pneg %p106
        $region38: #{tpu_custom_call.1} parent=35 // pred_check_branch
          %599 = sbr.rel (%p597) target = $region40
        $region39: #{tpu_custom_call.1} parent=35 // pred_region
          %s600 = sand.u32 %s91, 1
          %s601 = scalar_lea.sflag [#allocation3], %s600
          %s602 = sand.u32 %s91, 1
          %s603 = smul.addr %s602, 256
          %s604 = scalar_lea.vmem [#allocation2], %s603
          %605 = dma.done %s601, 4096
        $region40: #{tpu_custom_call.1} parent=35 // pred_fallthru
          _
      $region36: #{tpu_custom_call.1} parent=5 // pred_fallthru
        _
    $region6: #{tpu_custom_call.1} parent=1 // loop_footer
      %s15 = sadd.s32 1, %s11
    $region7: #{tpu_custom_call.1} parent=1 // loop_footer_branch
      %10 = sbr.rel target = $region3
    $region8: #{tpu_custom_call.1} parent=1 // loop_exit
      _
    %606 = vsyncpa [#allocation3], 1
    %s607 = scalar_lea.sflag [#allocation3], 1
    %608 = vsyncpa %s607, 1

</llo_original>
